<compile_context>
chip_gen: v5e
topology: v5e:2x2
jax: 0.10.0
libtpu: 0.0.40
codegen_flags: <defaults>
</compile_context>

<pallas_src>
import functools

import jax
import jax.numpy as jnp
from jax.experimental import pallas as pl
from jax.experimental.pallas import tpu as pltpu


def _round_up(x, m):
    return ((x + m - 1) // m) * m


def _padded_bytes(rows, cols, itemsize):
    """VMEM bytes of a (rows, cols) array after (sublane, lane) tiling.
    Sublane packing is 32 bytes deep: 8 rows for f32, 16 rows for bf16."""
    sub = max(1, 32 // itemsize)
    return _round_up(rows, sub) * _round_up(cols, 128) * itemsize


def _tile_vmem_bytes(tb, obs_dim, h1, h2, in_itemsize):
    """Generous per-grid-step VMEM estimate (padded shapes, no buffer reuse)."""
    obs_stream = 2 * _padded_bytes(obs_dim, tb, in_itemsize)      # dbl-buffered input tile
    out_stream = 2 * _padded_bytes(1, tb, 4)                      # dbl-buffered (1, TB) f32 out
    h_f32 = _padded_bytes(h1, tb, 4) + _padded_bytes(h2, tb, 4)   # tanh activations (f32)
    h_lo = (_padded_bytes(h1, tb, in_itemsize)
            + _padded_bytes(h2, tb, in_itemsize))                 # casts feeding the next dot
    mxu_tmp = max(_padded_bytes(h1, tb, 4), _padded_bytes(h2, tb, 4))  # pre-bias dot result
    return obs_stream + out_stream + h_f32 + h_lo + mxu_tmp


_VMEM_TILE_BUDGET = 24 * 1024 * 1024   # conservative for v7x (64 MiB physical VMEM per TC)


def _choose_tile(n, obs_dim, h1, h2, block_rows, in_itemsize):
    n128 = _round_up(max(n, 1), 128)
    tb = max(128, min(_round_up(block_rows, 128), n128))
    # Shrink until the padded working set fits the per-tile VMEM budget.
    while tb > 128 and _tile_vmem_bytes(tb, obs_dim, h1, h2, in_itemsize) > _VMEM_TILE_BUDGET:
        tb = max(128, _round_up(tb // 2, 128))
    # Megacore: make sure there are >= 2 grid tiles whenever the batch allows,
    # so the "parallel" batch axis can shard across both v7x TensorCores.
    if n128 >= 256 and tb >= n128:
        tb = _round_up(n128 // 2, 128)
    n_tiles = -(-n // tb)
    return tb, n_tiles


def _critic_kernel(x_ref, w1_ref, b1_ref, w2_ref, b2_ref, w3_ref, b3_ref, out_ref):
    """Feature-major fused MLP: batch stays on the lane axis throughout."""
    x = x_ref[...]                                                  # (obs_dim, TB)
    h = jnp.dot(w1_ref[...], x, preferred_element_type=jnp.float32) + b1_ref[...]
    h = jnp.tanh(h)                                                 # (h1, TB) f32
    h = jnp.dot(w2_ref[...], h.astype(w2_ref.dtype),
                preferred_element_type=jnp.float32) + b2_ref[...]
    h = jnp.tanh(h)                                                 # (h2, TB) f32
    v = jnp.dot(w3_ref[...], h.astype(w3_ref.dtype),
                preferred_element_type=jnp.float32) + b3_ref[...]   # (1, TB)
    out_ref[...] = v.astype(out_ref.dtype)                          # lane-dense store


def prepare_params(params, compute_dtype=jnp.bfloat16):
    """One-time conversion from PyTorch nn.Linear convention (W: [out, in],
    b: [out]) to kernel layout.  Weights stored in the matmul compute dtype
    (bf16 by default); biases stay f32 so bias-add/tanh run in f32 on every TPU
    generation.  Call OUTSIDE the training step (no per-call transposes)."""
    f32 = jnp.float32
    return {
        "w1": jnp.asarray(params["w1"], f32).astype(compute_dtype),  # (h1, obs_dim)
        "b1": jnp.asarray(params["b1"], f32).reshape(-1, 1),         # (h1, 1)
        "w2": jnp.asarray(params["w2"], f32).astype(compute_dtype),  # (h2, h1)
        "b2": jnp.asarray(params["b2"], f32).reshape(-1, 1),         # (h2, 1)
        "w3": jnp.asarray(params["w3"], f32).astype(compute_dtype),  # (1, h2)
        "b3": jnp.asarray(params["b3"], f32).reshape(1, 1),          # (1, 1)
    }


@functools.partial(jax.jit, static_argnames=("block_rows",))
def mlp_critic_forward(obs, kparams, *, block_rows=32768):
    """obs: [n, obs_dim]; kparams: output of prepare_params().
    Returns value estimates [n]  (== torch.squeeze(v_net(obs), -1))."""
    n, obs_dim = obs.shape
    h1 = kparams["w1"].shape[0]
    h2 = kparams["w2"].shape[0]
    compute_dtype = kparams["w1"].dtype
    in_itemsize = jnp.dtype(compute_dtype).itemsize

    # Batch-on-lanes: single fused cast+transpose pass (layout plumbing outside
    # the kernel).  (obs_dim, n) is then streamed as (obs_dim, TB) lane tiles.
    obs_t = obs.astype(compute_dtype).T

    tb, n_tiles = _choose_tile(n, obs_dim, h1, h2, block_rows, in_itemsize)

    # VMEM limit from the PADDED footprint (streamed tile + double-buffered
    # resident params) plus margin for compiler-internal scratch.
    param_bytes_padded = sum(
        2 * _padded_bytes(v.shape[0], v.shape[1], v.dtype.itemsize)
        for v in kparams.values())
    vmem_need = (_tile_vmem_bytes(tb, obs_dim, h1, h2, in_itemsize)
                 + param_bytes_padded + (8 << 20))
    vmem_limit = int(min(max(vmem_need, 16 << 20), 48 << 20))

    param_bytes = sum(int(v.size) * v.dtype.itemsize for v in kparams.values())
    cost = pl.CostEstimate(
        flops=2 * n * (obs_dim * h1 + h1 * h2 + h2),
        transcendentals=n * (h1 + h2),
        bytes_accessed=n * obs_dim * in_itemsize + param_bytes + n * 4,
    )

    out = pl.pallas_call(
        _critic_kernel,
        out_shape=jax.ShapeDtypeStruct((1, n), jnp.float32),
        grid_spec=pltpu.PrefetchScalarGridSpec(
            num_scalar_prefetch=0,
            grid=(n_tiles,),
            in_specs=[
                pl.BlockSpec((obs_dim, tb), lambda i: (0, i)),   # obs^T: streamed lane tiles
                pl.BlockSpec((h1, obs_dim), lambda i: (0, 0)),   # W1 (torch layout), resident
                pl.BlockSpec((h1, 1), lambda i: (0, 0)),         # b1 column
                pl.BlockSpec((h2, h1), lambda i: (0, 0)),        # W2, resident
                pl.BlockSpec((h2, 1), lambda i: (0, 0)),         # b2 column
                pl.BlockSpec((1, h2), lambda i: (0, 0)),         # W3, resident
                pl.BlockSpec((1, 1), lambda i: (0, 0)),          # b3
            ],
            # Block second-minor dim (1) equals the full output dim -> legal,
            # and every step writes one contiguous lane-dense (1, TB) row.
            out_specs=pl.BlockSpec((1, tb), lambda i: (0, i)),
        ),
        compiler_params=pltpu.CompilerParams(
            dimension_semantics=("parallel",),   # batch tiles shard across TCs (v7x megacore)
            vmem_limit_bytes=vmem_limit,
        ),
        cost_estimate=cost,
    )(obs_t, kparams["w1"], kparams["b1"], kparams["w2"], kparams["b2"],
      kparams["w3"], kparams["b3"])

    return out[0]


def init_params(key, obs_dim, hidden_sizes):
    """Deterministic init mirroring nn.Linear shapes: W [out, in], b [out]."""
    sizes = [obs_dim] + list(hidden_sizes) + [1]
    params = {}
    for j in range(len(sizes) - 1):
        key, kw, kb = jax.random.split(key, 3)
        fan_in = sizes[j]
        bound = 1.0 / jnp.sqrt(fan_in)
        params[f"w{j+1}"] = jax.random.uniform(
            kw, (sizes[j + 1], sizes[j]), jnp.float32, -bound, bound)
        params[f"b{j+1}"] = jax.random.uniform(
            kb, (sizes[j + 1],), jnp.float32, -bound, bound)
    return params


if __name__ == "__main__":
    key = jax.random.PRNGKey(0)
    batch, obs_dim = 8, 16
    hidden_sizes = (32, 32)   # standard TRPO critic: two tanh hidden layers

    k_obs, k_params = jax.random.split(key)
    obs = jax.random.normal(k_obs, (batch, obs_dim), jnp.float32)
    params = init_params(k_params, obs_dim, hidden_sizes)

    # Pure-JAX reference (same semantics as the PyTorch module's forward).
    h = jnp.tanh(obs @ params["w1"].T + params["b1"])
    h = jnp.tanh(h @ params["w2"].T + params["b2"])
    v_ref = jnp.squeeze(h @ params["w3"].T + params["b3"], -1)

    # f32-operand path: matches the f32 reference tightly.
    kparams_f32 = prepare_params(params, compute_dtype=jnp.float32)
    v32 = jax.block_until_ready(mlp_critic_forward(obs, kparams_f32))
    assert v32.shape == (batch,)
    assert jnp.allclose(v32, v_ref, atol=1e-5, rtol=1e-5), (v32, v_ref)

    # bf16-operand path (default; f32 accumulation) -- looser tolerance.
    kparams_bf16 = prepare_params(params)
    v16 = jax.block_until_ready(mlp_critic_forward(obs, kparams_bf16))
    assert v16.shape == (batch,)
    assert jnp.allclose(v16, v_ref, atol=5e-2, rtol=5e-2), (v16, v_ref)

    print("KERNEL_OK")
</pallas_src>

<mosaic_0001>
module attributes {stable_mosaic.version = 11 : i64} {
  func.func @_critic_kernel(%arg0: i32, %arg1: memref<16x128xf32, #tpu.memory_space<vmem>>, %arg2: memref<32x16xf32, #tpu.memory_space<vmem>>, %arg3: memref<32x1xf32, #tpu.memory_space<vmem>>, %arg4: memref<32x32xf32, #tpu.memory_space<vmem>>, %arg5: memref<32x1xf32, #tpu.memory_space<vmem>>, %arg6: memref<1x32xf32, #tpu.memory_space<vmem>>, %arg7: memref<1x1xf32, #tpu.memory_space<vmem>>, %arg8: memref<1x128xf32, #tpu.memory_space<vmem>>) attributes {dimension_semantics = [#tpu.dimension_semantics<parallel>], iteration_bounds = array<i64: 1>, scalar_prefetch = 0 : i64, scratch_operands = 0 : i64, tpu.core_type = #tpu.core_type<tc>, window_params = [{transform_indices = @transform_0, window_bounds = array<i64: 16, 128>}, {pipeline_mode = #tpu.pipeline_mode<synchronous>, transform_indices = @transform_1, window_bounds = array<i64: 32, 16>}, {pipeline_mode = #tpu.pipeline_mode<synchronous>, transform_indices = @transform_2, window_bounds = array<i64: 32, 1>}, {pipeline_mode = #tpu.pipeline_mode<synchronous>, transform_indices = @transform_3, window_bounds = array<i64: 32, 32>}, {pipeline_mode = #tpu.pipeline_mode<synchronous>, transform_indices = @transform_4, window_bounds = array<i64: 32, 1>}, {pipeline_mode = #tpu.pipeline_mode<synchronous>, transform_indices = @transform_5, window_bounds = array<i64: 1, 32>}, {pipeline_mode = #tpu.pipeline_mode<synchronous>, transform_indices = @transform_6, window_bounds = array<i64: 1, 1>}, {transform_indices = @transform_7, window_bounds = array<i64: 1, 128>}]} {
    %c0 = arith.constant 0 : index
    %c0_0 = arith.constant 0 : index
    %0 = vector.load %arg1[%c0, %c0_0] : memref<16x128xf32, #tpu.memory_space<vmem>>, vector<16x128xf32>
    %c0_1 = arith.constant 0 : index
    %c0_2 = arith.constant 0 : index
    %1 = vector.load %arg2[%c0_1, %c0_2] : memref<32x16xf32, #tpu.memory_space<vmem>>, vector<32x16xf32>
    %cst = arith.constant dense<0.000000e+00> : vector<32x128xf32>
    %2 = tpu.matmul %1, %0, %cst {dimension_numbers = #tpu.dot_dimension_numbers<[1], [0], [0], [1], [0, 0, 1, 1], [], []>} : vector<32x16xf32>, vector<16x128xf32>, vector<32x128xf32> -> vector<32x128xf32>
    %c0_3 = arith.constant 0 : index
    %c0_4 = arith.constant 0 : index
    %3 = vector.load %arg3[%c0_3, %c0_4] : memref<32x1xf32, #tpu.memory_space<vmem>>, vector<32x1xf32>
    %4 = vector.broadcast %3 : vector<32x1xf32> to vector<32x128xf32>
    %5 = arith.addf %2, %4 : vector<32x128xf32>
    %6 = math.tanh %5 : vector<32x128xf32>
    %c0_5 = arith.constant 0 : index
    %c0_6 = arith.constant 0 : index
    %7 = vector.load %arg4[%c0_5, %c0_6] : memref<32x32xf32, #tpu.memory_space<vmem>>, vector<32x32xf32>
    %cst_7 = arith.constant dense<0.000000e+00> : vector<32x128xf32>
    %8 = tpu.matmul %7, %6, %cst_7 {dimension_numbers = #tpu.dot_dimension_numbers<[1], [0], [0], [1], [0, 0, 1, 1], [], []>} : vector<32x32xf32>, vector<32x128xf32>, vector<32x128xf32> -> vector<32x128xf32>
    %c0_8 = arith.constant 0 : index
    %c0_9 = arith.constant 0 : index
    %9 = vector.load %arg5[%c0_8, %c0_9] : memref<32x1xf32, #tpu.memory_space<vmem>>, vector<32x1xf32>
    %10 = vector.broadcast %9 : vector<32x1xf32> to vector<32x128xf32>
    %11 = arith.addf %8, %10 : vector<32x128xf32>
    %12 = math.tanh %11 : vector<32x128xf32>
    %c0_10 = arith.constant 0 : index
    %c0_11 = arith.constant 0 : index
    %13 = vector.load %arg6[%c0_10, %c0_11] : memref<1x32xf32, #tpu.memory_space<vmem>>, vector<1x32xf32>
    %cst_12 = arith.constant dense<0.000000e+00> : vector<1x128xf32>
    %14 = tpu.matmul %13, %12, %cst_12 {dimension_numbers = #tpu.dot_dimension_numbers<[1], [0], [0], [1], [0, 0, 1, 1], [], []>} : vector<1x32xf32>, vector<32x128xf32>, vector<1x128xf32> -> vector<1x128xf32>
    %c0_13 = arith.constant 0 : index
    %c0_14 = arith.constant 0 : index
    %15 = vector.load %arg7[%c0_13, %c0_14] : memref<1x1xf32, #tpu.memory_space<vmem>>, vector<1x1xf32>
    %16 = vector.broadcast %15 : vector<1x1xf32> to vector<1x128xf32>
    %17 = arith.addf %14, %16 : vector<1x128xf32>
    %c0_15 = arith.constant 0 : index
    %c0_16 = arith.constant 0 : index
    %18 = vector.load %arg8[%c0_15, %c0_16] : memref<1x128xf32, #tpu.memory_space<vmem>>, vector<1x128xf32>
    tpu.vector_store %arg8[%c0_15, %c0_16], %17 {strides = array<i32>} : memref<1x128xf32, #tpu.memory_space<vmem>>, vector<1x128xf32>,
    return
  }
  func.func @transform_0(%arg0: i32) -> (i32, i32) {
    %c0_i32 = arith.constant 0 : i32
    %c0_i32_0 = arith.constant 0 : i32
    return %c0_i32, %arg0 : i32, i32
  }
  func.func @transform_1(%arg0: i32) -> (i32, i32) {
    %c0_i32 = arith.constant 0 : i32
    %c0_i32_0 = arith.constant 0 : i32
    %c0_i32_1 = arith.constant 0 : i32
    return %c0_i32, %c0_i32_0 : i32, i32
  }
  func.func @transform_2(%arg0: i32) -> (i32, i32) {
    %c0_i32 = arith.constant 0 : i32
    %c0_i32_0 = arith.constant 0 : i32
    %c0_i32_1 = arith.constant 0 : i32
    return %c0_i32, %c0_i32_0 : i32, i32
  }
  func.func @transform_3(%arg0: i32) -> (i32, i32) {
    %c0_i32 = arith.constant 0 : i32
    %c0_i32_0 = arith.constant 0 : i32
    %c0_i32_1 = arith.constant 0 : i32
    return %c0_i32, %c0_i32_0 : i32, i32
  }
  func.func @transform_4(%arg0: i32) -> (i32, i32) {
    %c0_i32 = arith.constant 0 : i32
    %c0_i32_0 = arith.constant 0 : i32
    %c0_i32_1 = arith.constant 0 : i32
    return %c0_i32, %c0_i32_0 : i32, i32
  }
  func.func @transform_5(%arg0: i32) -> (i32, i32) {
    %c0_i32 = arith.constant 0 : i32
    %c0_i32_0 = arith.constant 0 : i32
    %c0_i32_1 = arith.constant 0 : i32
    return %c0_i32, %c0_i32_0 : i32, i32
  }
  func.func @transform_6(%arg0: i32) -> (i32, i32) {
    %c0_i32 = arith.constant 0 : i32
    %c0_i32_0 = arith.constant 0 : i32
    %c0_i32_1 = arith.constant 0 : i32
    return %c0_i32, %c0_i32_0 : i32, i32
  }
  func.func @transform_7(%arg0: i32) -> (i32, i32) {
    %c0_i32 = arith.constant 0 : i32
    %c0_i32_0 = arith.constant 0 : i32
    return %c0_i32, %arg0 : i32, i32
  }
}

</mosaic_0001>

<llo_original>
// kernel: mlp_critic_forward.1
$region0: #{mlp_critic_forward.1}
  #allocation0 [shape = 'u32[]', space=smem, size = 0x4, offset = 0x4, fixed_abs, tag = 'smem constant byte address 0x4 - core index']
  #allocation1 [shape = 'u32[72,128]{1,0:T(1,128)}', space=vmem, size = 0x9000, scoped, tag = 'internal scratch']
  #allocation2 [shape = 'f32[1,1]{1,0:T(1,128)S(1)}', space=vmem, size = 0x200, scoped, tag = 'scoped memory for mlp_critic_forward.1']
  %s0 = inlined_call_operand.vmem [shape: f32[16,8], index: 0, kind: input, shape index: {}]
  %s1 = inlined_call_operand.vmem [shape: f32[32,16], index: 1, kind: input, shape index: {}]
  %s2 = inlined_call_operand.vmem [shape: f32[32,1], index: 2, kind: input, shape index: {}]
  %s3 = inlined_call_operand.vmem [shape: f32[32,32], index: 3, kind: input, shape index: {}]
  %s4 = inlined_call_operand.vmem [shape: f32[32,1], index: 4, kind: input, shape index: {}]
  %s5 = inlined_call_operand.vmem [shape: f32[1,32], index: 5, kind: input, shape index: {}]
  %s6 = inlined_call_operand.<no memory space> [shape: f32[1,1], index: 6, kind: input, shape index: {}]
  %s7 = inlined_call_operand.hbm [shape: f32[1,8], index: 7, kind: output, shape index: {}]
  %s8 = sld [smem:[#allocation0]]
  $region38: #{mlp_critic_forward.1} parent=0
    _
  %s10 = ssub.s32 1, %s8
  %s11 = scalar_select 0, %s10, %s8
  %v12 = vstv %s6
  %13 = vst [vmem:[#allocation2] sm:$0x1] %v12
  $region1: #{mlp_critic_forward.1} parent=0
    #allocation3 [shape = 'u8[512]{0}', space=vmem, size = 0x400, scoped, tag = 'output window, operand 0, single buffered']
    #allocation4 [shape = 's32[1]{0}', space=sflag, size = 0x4, scoped, tag = 'scoped memory for mlp_critic_forward.1']
    %14 = vsyncpa [#allocation4], 0
    // Predicated region
    $region2: #{mlp_critic_forward.1} parent=1 // pred_check
      _
    $region3: #{mlp_critic_forward.1} parent=1 // pred_check_branch
      %16 = sbr.rel (0) target = $region5
    $region4: #{mlp_critic_forward.1} parent=1 // pred_region
      _
    $region5: #{mlp_critic_forward.1} parent=1 // pred_fallthru
      _
    // Predicated region
    $region6: #{mlp_critic_forward.1} parent=1 // pred_check
      _
    $region7: #{mlp_critic_forward.1} parent=1 // pred_check_branch
      %18 = sbr.rel (0) target = $region9
    $region8: #{mlp_critic_forward.1} parent=1 // pred_region
      _
    $region9: #{mlp_critic_forward.1} parent=1 // pred_fallthru
      _
    // Predicated region
    $region10: #{mlp_critic_forward.1} parent=1 // pred_check
      _
    $region11: #{mlp_critic_forward.1} parent=1 // pred_check_branch
      %20 = sbr.rel (0) target = $region13
    $region12: #{mlp_critic_forward.1} parent=1 // pred_region
      _
    $region13: #{mlp_critic_forward.1} parent=1 // pred_fallthru
      _
    // Predicated region
    $region14: #{mlp_critic_forward.1} parent=1 // pred_check
      _
    $region15: #{mlp_critic_forward.1} parent=1 // pred_check_branch
      %22 = sbr.rel (0) target = $region17
    $region16: #{mlp_critic_forward.1} parent=1 // pred_region
      _
    $region17: #{mlp_critic_forward.1} parent=1 // pred_fallthru
      _
    // Predicated region
    $region18: #{mlp_critic_forward.1} parent=1 // pred_check
      _
    $region19: #{mlp_critic_forward.1} parent=1 // pred_check_branch
      %24 = sbr.rel (0) target = $region21
    $region20: #{mlp_critic_forward.1} parent=1 // pred_region
      _
    $region21: #{mlp_critic_forward.1} parent=1 // pred_fallthru
      _
    // Predicated region
    $region22: #{mlp_critic_forward.1} parent=1 // pred_check
      _
    $region23: #{mlp_critic_forward.1} parent=1 // pred_check_branch
      %26 = sbr.rel (0) target = $region25
    $region24: #{mlp_critic_forward.1} parent=1 // pred_region
      _
    $region25: #{mlp_critic_forward.1} parent=1 // pred_fallthru
      _
    // Predicated region
    $region26: #{mlp_critic_forward.1} parent=1 // pred_check
      _
    $region27: #{mlp_critic_forward.1} parent=1 // pred_check_branch
      %28 = sbr.rel (0) target = $region29
    $region28: #{mlp_critic_forward.1} parent=1 // pred_region
      _
    $region29: #{mlp_critic_forward.1} parent=1 // pred_fallthru
      _
    %v29 = vld [vmem:[%s0] sm:$0xff]
    %v30 = vld [vmem:[%s0 + $0x8] sm:$0xff]
    %v31 = vld [vmem:[%s1] sm:$0xff]
    %v32 = vld [vmem:[%s1 + $0x8] sm:$0xff]
    %v33 = vld [vmem:[%s1 + $0x10] sm:$0xff]
    %v34 = vld [vmem:[%s1 + $0x18] sm:$0xff]
    %v35 = vld [vmem:[%s2] sm:$0xff]
    %v36 = vld [vmem:[%s2 + $0x8] sm:$0xff]
    %v37 = vld [vmem:[%s2 + $0x10] sm:$0xff]
    %v38 = vld [vmem:[%s2 + $0x18] sm:$0xff]
    %40 = vset.pattern.permute.xlu0 0
    %41 = vperm.xlu0 %40, %v35
    %v42 = vpop.permute.xlu0 %41
    %45 = vset.pattern.permute.xlu0 0
    %46 = vperm.xlu0 %45, %v36
    %v47 = vpop.permute.xlu0 %46
    %50 = vset.pattern.permute.xlu0 0
    %51 = vperm.xlu0 %50, %v37
    %v52 = vpop.permute.xlu0 %51
    %55 = vset.pattern.permute.xlu0 0
    %56 = vperm.xlu0 %55, %v38
    %v57 = vpop.permute.xlu0 %56
    %vm59 = vcmask 130048
    %v61 = vsel %vm59, %v31, 0
    %v64 = vsel %vm59, %v32, 0
    %v67 = vsel %vm59, %v33, 0
    %v70 = vsel %vm59, %v34, 0
    %72 = vmatpush.msra.mxu0 0.0
    %73 = vmatpush.msra.mxu0 0.0
    %74 = vmatpush.msra.mxu0 0.0
    %75 = vmatpush.msra.mxu0 0.0
    %76 = vmatpush.msra.mxu0 0.0
    %77 = vmatpush.msra.mxu0 0.0
    %78 = vmatpush.msra.mxu0 0.0
    %79 = vmatpush.msra.mxu0 0.0
    %80 = vmatpush.msra.mxu0 0.0
    %81 = vmatpush.msra.mxu0 0.0
    %82 = vmatpush.msra.mxu0 0.0
    %83 = vmatpush.msra.mxu0 0.0
    %84 = vmatpush.msra.mxu0 0.0
    %85 = vmatpush.msra.mxu0 0.0
    %86 = vmatpush.msra.mxu0 %v30
    %87 = vmatpush.msra.mxu0 %v29
    %88 = vmatmul.f32.gmra.mxu0 %v61
    %v89 = vpop.f32.mrf.mxu0
    %v90 = vadd.f32 %v42, %v89
    %91 = vmatmul.f32.gmra.mxu0 %v64
    %v92 = vpop.f32.mrf.mxu0
    %v93 = vadd.f32 %v47, %v92
    %94 = vmatmul.f32.gmra.mxu0 %v67
    %v95 = vpop.f32.mrf.mxu0
    %v96 = vadd.f32 %v52, %v95
    %97 = vmatmul.f32.gmra.mxu0 %v70
    %v98 = vpop.f32.mrf.mxu0
    %v99 = vadd.f32 %v57, %v98
    %100 = vdwg.mxu0
    %v101 = vtanh.pop %v90
    %v102 = vtanh.pop %v93
    %v103 = vtanh.pop %v96
    %v104 = vtanh.pop %v99
    %v105 = vld [vmem:[%s3] sm:$0xff]
    %v106 = vld [vmem:[%s3 + $0x8] sm:$0xff]
    %v107 = vld [vmem:[%s3 + $0x10] sm:$0xff]
    %v108 = vld [vmem:[%s3 + $0x18] sm:$0xff]
    %v109 = vld [vmem:[%s4] sm:$0xff]
    %v110 = vld [vmem:[%s4 + $0x8] sm:$0xff]
    %v111 = vld [vmem:[%s4 + $0x10] sm:$0xff]
    %v112 = vld [vmem:[%s4 + $0x18] sm:$0xff]
    %114 = vset.pattern.permute.xlu0 0
    %115 = vperm.xlu0 %114, %v109
    %v116 = vpop.permute.xlu0 %115
    %119 = vset.pattern.permute.xlu0 0
    %120 = vperm.xlu0 %119, %v110
    %v121 = vpop.permute.xlu0 %120
    %124 = vset.pattern.permute.xlu0 0
    %125 = vperm.xlu0 %124, %v111
    %v126 = vpop.permute.xlu0 %125
    %129 = vset.pattern.permute.xlu0 0
    %130 = vperm.xlu0 %129, %v112
    %v131 = vpop.permute.xlu0 %130
    %vm133 = vcmask 261120
    %v135 = vsel %vm133, %v105, 0
    %v138 = vsel %vm133, %v106, 0
    %v141 = vsel %vm133, %v107, 0
    %v144 = vsel %vm133, %v108, 0
    %146 = vmatpush.msra.mxu0 0.0
    %147 = vmatpush.msra.mxu0 0.0
    %148 = vmatpush.msra.mxu0 0.0
    %149 = vmatpush.msra.mxu0 0.0
    %150 = vmatpush.msra.mxu0 0.0
    %151 = vmatpush.msra.mxu0 0.0
    %152 = vmatpush.msra.mxu0 0.0
    %153 = vmatpush.msra.mxu0 0.0
    %154 = vmatpush.msra.mxu0 0.0
    %155 = vmatpush.msra.mxu0 0.0
    %156 = vmatpush.msra.mxu0 0.0
    %157 = vmatpush.msra.mxu0 0.0
    %158 = vmatpush.msra.mxu0 %v104
    %159 = vmatpush.msra.mxu0 %v103
    %160 = vmatpush.msra.mxu0 %v102
    %161 = vmatpush.msra.mxu0 %v101
    %162 = vmatmul.f32.gmra.mxu0 %v135
    %v163 = vpop.f32.mrf.mxu0
    %v164 = vadd.f32 %v116, %v163
    %165 = vmatmul.f32.gmra.mxu0 %v138
    %v166 = vpop.f32.mrf.mxu0
    %v167 = vadd.f32 %v121, %v166
    %168 = vmatmul.f32.gmra.mxu0 %v141
    %v169 = vpop.f32.mrf.mxu0
    %v170 = vadd.f32 %v126, %v169
    %171 = vmatmul.f32.gmra.mxu0 %v144
    %v172 = vpop.f32.mrf.mxu0
    %v173 = vadd.f32 %v131, %v172
    %174 = vdwg.mxu0
    %v175 = vtanh.pop %v164
    %v176 = vtanh.pop %v167
    %v177 = vtanh.pop %v170
    %v178 = vtanh.pop %v173
    %v179 = vld [vmem:[%s5] sm:$0x1]
    %v180 = vld [vmem:[#allocation2] sm:$0x1]
    %182 = vset.pattern.permute.xlu0 0
    %183 = vperm.xlu0 %182, %v180
    %v184 = vpop.permute.xlu0 %183
    %v186 = vperm.slane %v184, 0
    %v188 = vsel %vm133, %v179, 0
    %190 = vmatpush.msra.mxu0 0.0
    %191 = vmatpush.msra.mxu0 0.0
    %192 = vmatpush.msra.mxu0 0.0
    %193 = vmatpush.msra.mxu0 0.0
    %194 = vmatpush.msra.mxu0 0.0
    %195 = vmatpush.msra.mxu0 0.0
    %196 = vmatpush.msra.mxu0 0.0
    %197 = vmatpush.msra.mxu0 0.0
    %198 = vmatpush.msra.mxu0 0.0
    %199 = vmatpush.msra.mxu0 0.0
    %200 = vmatpush.msra.mxu0 0.0
    %201 = vmatpush.msra.mxu0 0.0
    %202 = vmatpush.msra.mxu0 %v178
    %203 = vmatpush.msra.mxu0 %v177
    %204 = vmatpush.msra.mxu0 %v176
    %205 = vmatpush.msra.mxu0 %v175
    %206 = vmatmul.f32.gmra.mxu0 %v188
    %v207 = vpop.f32.mrf.mxu0
    %v208 = vadd.f32 %v186, %v207
    %209 = vdwg.mxu0
    %210 = vst [vmem:[#allocation3] sm:$0x1] %v208
    // Predicated region
    $region30: #{mlp_critic_forward.1} parent=1 // pred_check
      _
    $region31: #{mlp_critic_forward.1} parent=1 // pred_check_branch
      %212 = sbr.rel (0) target = $region33
    $region32: #{mlp_critic_forward.1} parent=1 // pred_region
      %214 = vsyncadd [#allocation4], 0
      %s216 = sshll.u32 [#allocation3], 4
      %s217 = int_to_ptr.vmem [resolvable:$true] %s216
      %s218 = sshll.u32 %s7, 4
      %s219 = int_to_ptr.hbm [resolvable:$true] %s218
      %221 = dma.vmem_to_hbm [thread:$0]  %s217, 16, %s219, [#allocation4]
    $region33: #{mlp_critic_forward.1} parent=1 // pred_fallthru
      _
    // Predicated region
    $region34: #{mlp_critic_forward.1} parent=1 // pred_check
      _
    $region35: #{mlp_critic_forward.1} parent=1 // pred_check_branch
      %223 = sbr.rel (0) target = $region37
    $region36: #{mlp_critic_forward.1} parent=1 // pred_region
      %225 = dma.done [#allocation4], 16
    $region37: #{mlp_critic_forward.1} parent=1 // pred_fallthru
      _
    %226 = vsyncpa [#allocation4], 1

</llo_original>
